<compile_context>
chip_gen: v5e
topology: v5e:2x2
jax: 0.10.0
libtpu: 0.0.40
codegen_flags: <defaults>
</compile_context>

<pallas_src>
import jax
import jax.numpy as jnp
from jax.experimental import pallas as pl
from jax.experimental.pallas import tpu as pltpu

LANE = 128


def _round_up(x, m):
    return (x + m - 1) // m * m


def _pick_row_tile(n_pad, bytes_per_elem=2, budget_bytes=20 * 1024 * 1024):
    """Largest row tile in {512,256,128} whose double-buffered A_hat slab plus
    the resident dense operand fits a conservative cross-generation VMEM budget."""
    for cand in (512, 256, 128):
        if n_pad % cand:
            continue
        need = 2 * cand * n_pad * bytes_per_elem + n_pad * LANE * bytes_per_elem
        if need <= budget_bytes:
            return cand
    return 128


# ---------------------------------------------------------------------------
# Pallas kernels
# ---------------------------------------------------------------------------
def _proj_kernel(x_ref, w_ref, o_ref):
    # per-node feature projection: X_tile @ W   (bf16 in, f32 accumulate)
    o_ref[...] = jnp.dot(
        x_ref[...], w_ref[...], preferred_element_type=jnp.float32
    ).astype(o_ref.dtype)


def _agg_proj_kernel(adj_ref, xw_ref, b_ref, w2_ref, o_ref):
    # layer-1 aggregation + bias + ReLU, fused with layer-2 projection
    h = jnp.dot(adj_ref[...], xw_ref[...], preferred_element_type=jnp.float32)
    h = jnp.maximum(h + b_ref[...], 0.0).astype(w2_ref.dtype)
    o_ref[...] = jnp.dot(
        h, w2_ref[...], preferred_element_type=jnp.float32
    ).astype(o_ref.dtype)


def _agg_relu_kernel(adj_ref, p_ref, b_ref, o_ref):
    # layer-2 aggregation + bias + ReLU
    h = jnp.dot(adj_ref[...], p_ref[...], preferred_element_type=jnp.float32)
    o_ref[...] = jnp.maximum(h + b_ref[...], 0.0).astype(o_ref.dtype)


# ---------------------------------------------------------------------------
# Wrapper: padding, casting, row-tiled pallas_calls
# ---------------------------------------------------------------------------
def gcn_forward(adj_hat, x, w1, b1, w2, b2):
    n, f_in = x.shape
    hidden = w1.shape[1]
    d_model = w2.shape[1]

    f_pad = _round_up(f_in, LANE)
    h_pad = _round_up(hidden, LANE)
    d_pad = _round_up(d_model, LANE)
    n_pad = _round_up(n, LANE)
    tm = _pick_row_tile(n_pad)

    # ---- pad + cast (plain-JAX glue around the kernels) ----
    adj_p = jnp.zeros((n_pad, n_pad), jnp.bfloat16).at[:n, :n].set(
        adj_hat.astype(jnp.bfloat16))
    x_p = jnp.zeros((n_pad, f_pad), jnp.bfloat16).at[:n, :f_in].set(
        x.astype(jnp.bfloat16))
    w1_p = jnp.zeros((f_pad, h_pad), jnp.bfloat16).at[:f_in, :hidden].set(
        w1.astype(jnp.bfloat16))
    w2_p = jnp.zeros((h_pad, d_pad), jnp.bfloat16).at[:hidden, :d_model].set(
        w2.astype(jnp.bfloat16))
    b1_p = jnp.zeros((1, h_pad), jnp.float32).at[:, :hidden].set(
        b1.reshape(1, -1).astype(jnp.float32))
    b2_p = jnp.zeros((1, d_pad), jnp.float32).at[:, :d_model].set(
        b2.reshape(1, -1).astype(jnp.float32))

    grid = (n_pad // tm,)
    cparams = pltpu.CompilerParams(
        dimension_semantics=("parallel",),
        vmem_limit_bytes=64 * 1024 * 1024,
    )

    def rows(shape):      # row-tiled along the node axis
        return pl.BlockSpec(shape, lambda i: (i,) + (0,) * (len(shape) - 1))

    def full(shape):      # small operand, fully resident (not re-fetched)
        return pl.BlockSpec(shape, lambda i: (0,) * len(shape))

    # --- stage 1: XW1 = X @ W1 ---------------------------------------------
    xw1 = pl.pallas_call(
        _proj_kernel,
        out_shape=jax.ShapeDtypeStruct((n_pad, h_pad), jnp.bfloat16),
        grid=grid,
        in_specs=[rows((tm, f_pad)), full((f_pad, h_pad))],
        out_specs=rows((tm, h_pad)),
        compiler_params=cparams,
        cost_estimate=pl.CostEstimate(
            flops=2 * n_pad * f_pad * h_pad,
            transcendentals=0,
            bytes_accessed=2 * (n_pad * f_pad + f_pad * h_pad + n_pad * h_pad)),
    )(x_p, w1_p)

    # --- stage 2: P2 = relu(A_hat @ XW1 + b1) @ W2 --------------------------
    p2 = pl.pallas_call(
        _agg_proj_kernel,
        out_shape=jax.ShapeDtypeStruct((n_pad, d_pad), jnp.bfloat16),
        grid=grid,
        in_specs=[rows((tm, n_pad)), full((n_pad, h_pad)),
                  full((1, h_pad)), full((h_pad, d_pad))],
        out_specs=rows((tm, d_pad)),
        compiler_params=cparams,
        cost_estimate=pl.CostEstimate(
            flops=2 * n_pad * n_pad * h_pad + 2 * n_pad * h_pad * d_pad,
            transcendentals=0,
            bytes_accessed=2 * (n_pad * n_pad + n_pad * h_pad
                                + h_pad * d_pad + n_pad * d_pad)),
    )(adj_p, xw1, b1_p, w2_p)

    # --- stage 3: out = relu(A_hat @ P2 + b2) -------------------------------
    out_p = pl.pallas_call(
        _agg_relu_kernel,
        out_shape=jax.ShapeDtypeStruct((n_pad, d_pad), jnp.float32),
        grid=grid,
        in_specs=[rows((tm, n_pad)), full((n_pad, d_pad)), full((1, d_pad))],
        out_specs=rows((tm, d_pad)),
        compiler_params=cparams,
        cost_estimate=pl.CostEstimate(
            flops=2 * n_pad * n_pad * d_pad,
            transcendentals=0,
            bytes_accessed=2 * (n_pad * n_pad + n_pad * d_pad)
                           + 4 * n_pad * d_pad),
    )(adj_p, p2, b2_p)

    return out_p[:n, :d_model]


# ---------------------------------------------------------------------------
# Glue: edge_index (2, E) -> dense symmetric-normalized adjacency A_hat [N, N]
# TODO(synk): for E << N^2 a block-sparse / scalar-prefetch gather formulation
# would avoid the O(N^2) dense aggregation; dense is used here for simplicity.
# ---------------------------------------------------------------------------
def normalized_adjacency(edge_index, num_nodes):
    src = edge_index[0]
    dst = edge_index[1]
    adj = jnp.zeros((num_nodes, num_nodes), jnp.float32)
    adj = adj.at[dst, src].set(1.0)                  # message flows src -> dst
    adj = adj + jnp.eye(num_nodes, dtype=jnp.float32)
    adj = jnp.minimum(adj, 1.0)                      # dedupe
    deg = adj.sum(axis=1)
    d_inv_sqrt = jnp.where(deg > 0, 1.0 / jnp.sqrt(deg), 0.0)
    return d_inv_sqrt[:, None] * adj * d_inv_sqrt[None, :]


# ---------------------------------------------------------------------------
# Parameter init (Glorot weights, zero bias — matches GCNConv defaults)
# ---------------------------------------------------------------------------
def init_gcn_params(key, num_node_features, d_model, hidden=16):
    k1, k2 = jax.random.split(key)

    def glorot(k, fan_in, fan_out):
        lim = jnp.sqrt(6.0 / (fan_in + fan_out))
        return jax.random.uniform(k, (fan_in, fan_out), jnp.float32, -lim, lim)

    w1 = glorot(k1, num_node_features, hidden)
    b1 = jnp.zeros((1, hidden), jnp.float32)
    w2 = glorot(k2, hidden, d_model)
    b2 = jnp.zeros((1, d_model), jnp.float32)
    return w1, b1, w2, b2


# ---------------------------------------------------------------------------
# Pure-JAX f32 reference
# ---------------------------------------------------------------------------
def gcn_forward_ref(adj_hat, x, w1, b1, w2, b2):
    h = jnp.maximum(adj_hat @ (x @ w1) + b1, 0.0)
    h = jnp.maximum(adj_hat @ (h @ w2) + b2, 0.0)
    return h


if __name__ == "__main__":
    key = jax.random.PRNGKey(0)
    k_x, k_e, k_p = jax.random.split(key, 3)

    N = 32                 # number of graph nodes
    F_IN = 8               # num_node_features
    HIDDEN = 16            # GCNConv hidden width (fixed in the module)
    D_MODEL = 64           # d_model (module-level model_dim)

    # node features
    x = jax.random.normal(k_x, (N, F_IN), jnp.float32)

    # deterministic edge_index: bidirectional ring + a few random edges
    ring_src = jnp.arange(N, dtype=jnp.int32)
    ring_dst = (ring_src + 1) % N
    rand_src = jax.random.randint(k_e, (16,), 0, N, dtype=jnp.int32)
    rand_dst = jax.random.randint(jax.random.fold_in(k_e, 1), (16,), 0, N,
                                  dtype=jnp.int32)
    src = jnp.concatenate([ring_src, ring_dst, rand_src, rand_dst])
    dst = jnp.concatenate([ring_dst, ring_src, rand_dst, rand_src])
    edge_index = jnp.stack([src, dst], axis=0)          # (2, E)

    adj_hat = normalized_adjacency(edge_index, N)       # [N, N]
    w1, b1, w2, b2 = init_gcn_params(k_p, F_IN, D_MODEL, HIDDEN)

    gcn = jax.jit(gcn_forward)
    out = gcn(adj_hat, x, w1, b1, w2, b2)
    out = jax.block_until_ready(out)

    ref = gcn_forward_ref(adj_hat, x, w1, b1, w2, b2)
    assert out.shape == (N, D_MODEL)
    # bf16 matmul inputs with f32 accumulation: allow ~1e-2 level deviation.
    assert jnp.allclose(out, ref, atol=3e-2, rtol=3e-2), "mismatch vs reference"

    print("KERNEL_OK")
</pallas_src>

<mosaic_0001>
module attributes {stable_mosaic.version = 11 : i64} {
  func.func @_proj_kernel(%arg0: i32, %arg1: memref<128x128xbf16, #tpu.memory_space<vmem>>, %arg2: memref<128x128xbf16, #tpu.memory_space<vmem>>, %arg3: memref<128x128xbf16, #tpu.memory_space<vmem>>) attributes {dimension_semantics = [#tpu.dimension_semantics<parallel>], iteration_bounds = array<i64: 1>, scalar_prefetch = 0 : i64, scratch_operands = 0 : i64, tpu.core_type = #tpu.core_type<tc>, window_params = [{transform_indices = @transform_0, window_bounds = array<i64: 128, 128>}, {pipeline_mode = #tpu.pipeline_mode<synchronous>, transform_indices = @transform_1, window_bounds = array<i64: 128, 128>}, {transform_indices = @transform_2, window_bounds = array<i64: 128, 128>}]} {
    %c0 = arith.constant 0 : index
    %c0_0 = arith.constant 0 : index
    %0 = vector.load %arg1[%c0, %c0_0] : memref<128x128xbf16, #tpu.memory_space<vmem>>, vector<128x128xbf16>
    %c0_1 = arith.constant 0 : index
    %c0_2 = arith.constant 0 : index
    %1 = vector.load %arg2[%c0_1, %c0_2] : memref<128x128xbf16, #tpu.memory_space<vmem>>, vector<128x128xbf16>
    %cst = arith.constant dense<0.000000e+00> : vector<128x128xf32>
    %2 = tpu.matmul %0, %1, %cst {dimension_numbers = #tpu.dot_dimension_numbers<[1], [0], [0], [1], [0, 0, 1, 1], [], []>} : vector<128x128xbf16>, vector<128x128xbf16>, vector<128x128xf32> -> vector<128x128xf32>
    %3 = arith.truncf %2 : vector<128x128xf32> to vector<128x128xbf16>
    %c0_3 = arith.constant 0 : index
    %c0_4 = arith.constant 0 : index
    %4 = vector.load %arg3[%c0_3, %c0_4] : memref<128x128xbf16, #tpu.memory_space<vmem>>, vector<128x128xbf16>
    tpu.vector_store %arg3[%c0_3, %c0_4], %3 {strides = array<i32>} : memref<128x128xbf16, #tpu.memory_space<vmem>>, vector<128x128xbf16>,
    return
  }
  func.func @transform_0(%arg0: i32) -> (i32, i32) {
    %c0_i32 = arith.constant 0 : i32
    %c0_i32_0 = arith.constant 0 : i32
    return %arg0, %c0_i32 : i32, i32
  }
  func.func @transform_1(%arg0: i32) -> (i32, i32) {
    %c0_i32 = arith.constant 0 : i32
    %c0_i32_0 = arith.constant 0 : i32
    %c0_i32_1 = arith.constant 0 : i32
    return %c0_i32, %c0_i32_0 : i32, i32
  }
  func.func @transform_2(%arg0: i32) -> (i32, i32) {
    %c0_i32 = arith.constant 0 : i32
    %c0_i32_0 = arith.constant 0 : i32
    return %arg0, %c0_i32 : i32, i32
  }
}

module attributes {stable_mosaic.version = 11 : i64} {
  func.func @_agg_proj_kernel(%arg0: i32, %arg1: memref<128x128xbf16, #tpu.memory_space<vmem>>, %arg2: memref<128x128xbf16, #tpu.memory_space<vmem>>, %arg3: memref<1x128xf32, #tpu.memory_space<vmem>>, %arg4: memref<128x128xbf16, #tpu.memory_space<vmem>>, %arg5: memref<128x128xbf16, #tpu.memory_space<vmem>>) attributes {dimension_semantics = [#tpu.dimension_semantics<parallel>], iteration_bounds = array<i64: 1>, scalar_prefetch = 0 : i64, scratch_operands = 0 : i64, tpu.core_type = #tpu.core_type<tc>, window_params = [{transform_indices = @transform_0, window_bounds = array<i64: 128, 128>}, {pipeline_mode = #tpu.pipeline_mode<synchronous>, transform_indices = @transform_1, window_bounds = array<i64: 128, 128>}, {pipeline_mode = #tpu.pipeline_mode<synchronous>, transform_indices = @transform_2, window_bounds = array<i64: 1, 128>}, {pipeline_mode = #tpu.pipeline_mode<synchronous>, transform_indices = @transform_3, window_bounds = array<i64: 128, 128>}, {transform_indices = @transform_4, window_bounds = array<i64: 128, 128>}]} {
    %c0 = arith.constant 0 : index
    %c0_0 = arith.constant 0 : index
    %0 = vector.load %arg1[%c0, %c0_0] : memref<128x128xbf16, #tpu.memory_space<vmem>>, vector<128x128xbf16>
    %c0_1 = arith.constant 0 : index
    %c0_2 = arith.constant 0 : index
    %1 = vector.load %arg2[%c0_1, %c0_2] : memref<128x128xbf16, #tpu.memory_space<vmem>>, vector<128x128xbf16>
    %cst = arith.constant dense<0.000000e+00> : vector<128x128xf32>
    %2 = tpu.matmul %0, %1, %cst {dimension_numbers = #tpu.dot_dimension_numbers<[1], [0], [0], [1], [0, 0, 1, 1], [], []>} : vector<128x128xbf16>, vector<128x128xbf16>, vector<128x128xf32> -> vector<128x128xf32>
    %c0_3 = arith.constant 0 : index
    %c0_4 = arith.constant 0 : index
    %3 = vector.load %arg3[%c0_3, %c0_4] : memref<1x128xf32, #tpu.memory_space<vmem>>, vector<1x128xf32>
    %4 = vector.broadcast %3 : vector<1x128xf32> to vector<128x128xf32>
    %5 = arith.addf %2, %4 : vector<128x128xf32>
    %cst_5 = arith.constant 0.000000e+00 : f32
    %6 = vector.broadcast %cst_5 : f32 to vector<128x128xf32>
    %7 = arith.maximumf %5, %6 : vector<128x128xf32>
    %8 = arith.truncf %7 : vector<128x128xf32> to vector<128x128xbf16>
    %c0_6 = arith.constant 0 : index
    %c0_7 = arith.constant 0 : index
    %9 = vector.load %arg4[%c0_6, %c0_7] : memref<128x128xbf16, #tpu.memory_space<vmem>>, vector<128x128xbf16>
    %cst_8 = arith.constant dense<0.000000e+00> : vector<128x128xf32>
    %10 = tpu.matmul %8, %9, %cst_8 {dimension_numbers = #tpu.dot_dimension_numbers<[1], [0], [0], [1], [0, 0, 1, 1], [], []>} : vector<128x128xbf16>, vector<128x128xbf16>, vector<128x128xf32> -> vector<128x128xf32>
    %11 = arith.truncf %10 : vector<128x128xf32> to vector<128x128xbf16>
    %c0_9 = arith.constant 0 : index
    %c0_10 = arith.constant 0 : index
    %12 = vector.load %arg5[%c0_9, %c0_10] : memref<128x128xbf16, #tpu.memory_space<vmem>>, vector<128x128xbf16>
    tpu.vector_store %arg5[%c0_9, %c0_10], %11 {strides = array<i32>} : memref<128x128xbf16, #tpu.memory_space<vmem>>, vector<128x128xbf16>,
    return
  }
  func.func @transform_0(%arg0: i32) -> (i32, i32) {
    %c0_i32 = arith.constant 0 : i32
    %c0_i32_0 = arith.constant 0 : i32
    return %arg0, %c0_i32 : i32, i32
  }
  func.func @transform_1(%arg0: i32) -> (i32, i32) {
    %c0_i32 = arith.constant 0 : i32
    %c0_i32_0 = arith.constant 0 : i32
    %c0_i32_1 = arith.constant 0 : i32
    return %c0_i32, %c0_i32_0 : i32, i32
  }
  func.func @transform_2(%arg0: i32) -> (i32, i32) {
    %c0_i32 = arith.constant 0 : i32
    %c0_i32_0 = arith.constant 0 : i32
    %c0_i32_1 = arith.constant 0 : i32
    return %c0_i32, %c0_i32_0 : i32, i32
  }
  func.func @transform_3(%arg0: i32) -> (i32, i32) {
    %c0_i32 = arith.constant 0 : i32
    %c0_i32_0 = arith.constant 0 : i32
    %c0_i32_1 = arith.constant 0 : i32
    return %c0_i32, %c0_i32_0 : i32, i32
  }
  func.func @transform_4(%arg0: i32) -> (i32, i32) {
    %c0_i32 = arith.constant 0 : i32
    %c0_i32_0 = arith.constant 0 : i32
    return %arg0, %c0_i32 : i32, i32
  }
}

module attributes {stable_mosaic.version = 11 : i64} {
  func.func @_agg_relu_kernel(%arg0: i32, %arg1: memref<128x128xbf16, #tpu.memory_space<vmem>>, %arg2: memref<128x128xbf16, #tpu.memory_space<vmem>>, %arg3: memref<1x128xf32, #tpu.memory_space<vmem>>, %arg4: memref<128x128xf32, #tpu.memory_space<vmem>>) attributes {dimension_semantics = [#tpu.dimension_semantics<parallel>], iteration_bounds = array<i64: 1>, scalar_prefetch = 0 : i64, scratch_operands = 0 : i64, tpu.core_type = #tpu.core_type<tc>, window_params = [{transform_indices = @transform_0, window_bounds = array<i64: 128, 128>}, {pipeline_mode = #tpu.pipeline_mode<synchronous>, transform_indices = @transform_1, window_bounds = array<i64: 128, 128>}, {pipeline_mode = #tpu.pipeline_mode<synchronous>, transform_indices = @transform_2, window_bounds = array<i64: 1, 128>}, {transform_indices = @transform_3, window_bounds = array<i64: 128, 128>}]} {
    %c0 = arith.constant 0 : index
    %c0_0 = arith.constant 0 : index
    %0 = vector.load %arg1[%c0, %c0_0] : memref<128x128xbf16, #tpu.memory_space<vmem>>, vector<128x128xbf16>
    %c0_1 = arith.constant 0 : index
    %c0_2 = arith.constant 0 : index
    %1 = vector.load %arg2[%c0_1, %c0_2] : memref<128x128xbf16, #tpu.memory_space<vmem>>, vector<128x128xbf16>
    %cst = arith.constant dense<0.000000e+00> : vector<128x128xf32>
    %2 = tpu.matmul %0, %1, %cst {dimension_numbers = #tpu.dot_dimension_numbers<[1], [0], [0], [1], [0, 0, 1, 1], [], []>} : vector<128x128xbf16>, vector<128x128xbf16>, vector<128x128xf32> -> vector<128x128xf32>
    %c0_3 = arith.constant 0 : index
    %c0_4 = arith.constant 0 : index
    %3 = vector.load %arg3[%c0_3, %c0_4] : memref<1x128xf32, #tpu.memory_space<vmem>>, vector<1x128xf32>
    %4 = vector.broadcast %3 : vector<1x128xf32> to vector<128x128xf32>
    %5 = arith.addf %2, %4 : vector<128x128xf32>
    %cst_5 = arith.constant 0.000000e+00 : f32
    %6 = vector.broadcast %cst_5 : f32 to vector<128x128xf32>
    %7 = arith.maximumf %5, %6 : vector<128x128xf32>
    %c0_6 = arith.constant 0 : index
    %c0_7 = arith.constant 0 : index
    %8 = vector.load %arg4[%c0_6, %c0_7] : memref<128x128xf32, #tpu.memory_space<vmem>>, vector<128x128xf32>
    tpu.vector_store %arg4[%c0_6, %c0_7], %7 {strides = array<i32>} : memref<128x128xf32, #tpu.memory_space<vmem>>, vector<128x128xf32>,
    return
  }
  func.func @transform_0(%arg0: i32) -> (i32, i32) {
    %c0_i32 = arith.constant 0 : i32
    %c0_i32_0 = arith.constant 0 : i32
    return %arg0, %c0_i32 : i32, i32
  }
  func.func @transform_1(%arg0: i32) -> (i32, i32) {
    %c0_i32 = arith.constant 0 : i32
    %c0_i32_0 = arith.constant 0 : i32
    %c0_i32_1 = arith.constant 0 : i32
    return %c0_i32, %c0_i32_0 : i32, i32
  }
  func.func @transform_2(%arg0: i32) -> (i32, i32) {
    %c0_i32 = arith.constant 0 : i32
    %c0_i32_0 = arith.constant 0 : i32
    %c0_i32_1 = arith.constant 0 : i32
    return %c0_i32, %c0_i32_0 : i32, i32
  }
  func.func @transform_3(%arg0: i32) -> (i32, i32) {
    %c0_i32 = arith.constant 0 : i32
    %c0_i32_0 = arith.constant 0 : i32
    return %arg0, %c0_i32 : i32, i32
  }
}

</mosaic_0001>

<llo_original>
// kernel: gcn_forward.5
$region0: #{gcn_forward.5}
  #allocation0 [shape = 'u32[]', space=smem, size = 0x4, offset = 0x4, fixed_abs, tag = 'smem constant byte address 0x4 - core index']
  #allocation1 [shape = 'u32[72,128]{1,0:T(1,128)}', space=vmem, size = 0x9000, scoped, tag = 'internal scratch']
  %s0 = inlined_call_operand.vmem [shape: bf16[128,128], index: 0, kind: input, shape index: {}]
  %s1 = inlined_call_operand.vmem [shape: bf16[128,128], index: 1, kind: input, shape index: {}]
  %s2 = inlined_call_operand.vmem [shape: f32[1,128], index: 2, kind: input, shape index: {}]
  %s3 = inlined_call_operand.vmem [shape: f32[128,128], index: 3, kind: output, shape index: {}]
  %s4 = sld [smem:[#allocation0]]
  $region22: #{gcn_forward.5} parent=0
    _
  %s6 = ssub.s32 1, %s4
  %s7 = scalar_select 0, %s6, %s4
  // Predicated region
  $region2: #{gcn_forward.5} parent=0 // pred_check
    _
  $region3: #{gcn_forward.5} parent=0 // pred_check_branch
    %9 = sbr.rel (0) target = $region5
  $region4: #{gcn_forward.5} parent=0 // pred_region
    _
  $region5: #{gcn_forward.5} parent=0 // pred_fallthru
    _
  // Predicated region
  $region6: #{gcn_forward.5} parent=0 // pred_check
    _
  $region7: #{gcn_forward.5} parent=0 // pred_check_branch
    %11 = sbr.rel (0) target = $region9
  $region8: #{gcn_forward.5} parent=0 // pred_region
    _
  $region9: #{gcn_forward.5} parent=0 // pred_fallthru
    _
  // Predicated region
  $region10: #{gcn_forward.5} parent=0 // pred_check
    _
  $region11: #{gcn_forward.5} parent=0 // pred_check_branch
    %13 = sbr.rel (0) target = $region13
  $region12: #{gcn_forward.5} parent=0 // pred_region
    _
  $region13: #{gcn_forward.5} parent=0 // pred_fallthru
    _
  %v14 = vld [vmem:[%s0] sm:$0xf]
  %v15 = vld [vmem:[%s0 + $0x4] sm:$0xf]
  %v16 = vld [vmem:[%s0 + $0x8] sm:$0xf]
  %v17 = vld [vmem:[%s0 + $0xc] sm:$0xf]
  %v18 = vld [vmem:[%s0 + $0x10] sm:$0xf]
  %v19 = vld [vmem:[%s0 + $0x14] sm:$0xf]
  %v20 = vld [vmem:[%s0 + $0x18] sm:$0xf]
  %v21 = vld [vmem:[%s0 + $0x1c] sm:$0xf]
  %v22 = vld [vmem:[%s0 + $0x20] sm:$0xf]
  %v23 = vld [vmem:[%s0 + $0x24] sm:$0xf]
  %v24 = vld [vmem:[%s0 + $0x28] sm:$0xf]
  %v25 = vld [vmem:[%s0 + $0x2c] sm:$0xf]
  %v26 = vld [vmem:[%s0 + $0x30] sm:$0xf]
  %v27 = vld [vmem:[%s0 + $0x34] sm:$0xf]
  %v28 = vld [vmem:[%s0 + $0x38] sm:$0xf]
  %v29 = vld [vmem:[%s0 + $0x3c] sm:$0xf]
  %v30 = vld [vmem:[%s1] sm:$0xf]
  %v31 = vld [vmem:[%s1 + $0x4] sm:$0xf]
  %v32 = vld [vmem:[%s1 + $0x8] sm:$0xf]
  %v33 = vld [vmem:[%s1 + $0xc] sm:$0xf]
  %v34 = vld [vmem:[%s1 + $0x10] sm:$0xf]
  %v35 = vld [vmem:[%s1 + $0x14] sm:$0xf]
  %v36 = vld [vmem:[%s1 + $0x18] sm:$0xf]
  %v37 = vld [vmem:[%s1 + $0x1c] sm:$0xf]
  %v38 = vld [vmem:[%s1 + $0x20] sm:$0xf]
  %v39 = vld [vmem:[%s1 + $0x24] sm:$0xf]
  %v40 = vld [vmem:[%s1 + $0x28] sm:$0xf]
  %v41 = vld [vmem:[%s1 + $0x2c] sm:$0xf]
  %v42 = vld [vmem:[%s1 + $0x30] sm:$0xf]
  %v43 = vld [vmem:[%s1 + $0x34] sm:$0xf]
  %v44 = vld [vmem:[%s1 + $0x38] sm:$0xf]
  %v45 = vld [vmem:[%s1 + $0x3c] sm:$0xf]
  %v46 = vld [vmem:[%s2] sm:$0x1]
  %v48 = vperm.slane %v46, 0
  %v66 = vunpack.c.l.b16 %v14
  %v67 = vunpack.c.l.b16 %v15
  %v68 = vunpack.c.l.b16 %v16
  %v69 = vunpack.c.l.b16 %v17
  %v70 = vunpack.c.l.b16 %v18
  %v71 = vunpack.c.l.b16 %v19
  %v72 = vunpack.c.l.b16 %v20
  %v73 = vunpack.c.l.b16 %v21
  %v74 = vunpack.c.l.b16 %v22
  %v75 = vunpack.c.l.b16 %v23
  %v76 = vunpack.c.l.b16 %v24
  %v77 = vunpack.c.l.b16 %v25
  %v78 = vunpack.c.l.b16 %v26
  %v79 = vunpack.c.l.b16 %v27
  %v80 = vunpack.c.l.b16 %v28
  %v81 = vunpack.c.l.b16 %v29
  %v82 = vpack.c.b16 %v67, %v66
  %v83 = vpack.c.b16 %v69, %v68
  %v84 = vpack.c.b16 %v71, %v70
  %v85 = vpack.c.b16 %v73, %v72
  %v86 = vpack.c.b16 %v75, %v74
  %v87 = vpack.c.b16 %v77, %v76
  %v88 = vpack.c.b16 %v79, %v78
  %v89 = vpack.c.b16 %v81, %v80
  %v114 = vunpack.c.l.b16 %v30
  %v115 = vunpack.c.l.b16 %v31
  %v116 = vunpack.c.l.b16 %v32
  %v117 = vunpack.c.l.b16 %v33
  %v118 = vunpack.c.l.b16 %v34
  %v119 = vunpack.c.l.b16 %v35
  %v120 = vunpack.c.l.b16 %v36
  %v121 = vunpack.c.l.b16 %v37
  %v122 = vunpack.c.l.b16 %v38
  %v123 = vunpack.c.l.b16 %v39
  %v124 = vunpack.c.l.b16 %v40
  %v125 = vunpack.c.l.b16 %v41
  %v126 = vunpack.c.l.b16 %v42
  %v127 = vunpack.c.l.b16 %v43
  %v128 = vunpack.c.l.b16 %v44
  %v129 = vunpack.c.l.b16 %v45
  %v130 = vpack.c.b16 %v115, %v114
  %v131 = vpack.c.b16 %v117, %v116
  %v132 = vpack.c.b16 %v119, %v118
  %v133 = vpack.c.b16 %v121, %v120
  %v134 = vpack.c.b16 %v123, %v122
  %v135 = vpack.c.b16 %v125, %v124
  %v136 = vpack.c.b16 %v127, %v126
  %v137 = vpack.c.b16 %v129, %v128
  %146 = vmatpush.bf16.msra.mxu0 %v137
  %147 = vmatpush.bf16.msra.mxu0 %v136
  %148 = vmatpush.bf16.msra.mxu0 %v135
  %149 = vmatpush.bf16.msra.mxu0 %v134
  %150 = vmatpush.bf16.msra.mxu0 %v133
  %151 = vmatpush.bf16.msra.mxu0 %v132
  %152 = vmatpush.bf16.msra.mxu0 %v131
  %153 = vmatpush.bf16.msra.mxu0 %v130
  %154 = vmatmul.bf16.gmra.mxu0 %v82
  %v155 = vpop.f32.mrf.mxu0
  %v156 = vadd.f32 %v48, %v155
  %v157 = vpop.f32.mrf.mxu0
  %v158 = vadd.f32 %v48, %v157
  %159 = vmatmul.bf16.gmra.mxu0 %v83
  %v160 = vpop.f32.mrf.mxu0
  %v161 = vadd.f32 %v48, %v160
  %v162 = vpop.f32.mrf.mxu0
  %v163 = vadd.f32 %v48, %v162
  %164 = vmatmul.bf16.gmra.mxu0 %v84
  %v165 = vpop.f32.mrf.mxu0
  %v166 = vadd.f32 %v48, %v165
  %v167 = vpop.f32.mrf.mxu0
  %v168 = vadd.f32 %v48, %v167
  %169 = vmatmul.bf16.gmra.mxu0 %v85
  %v170 = vpop.f32.mrf.mxu0
  %v171 = vadd.f32 %v48, %v170
  %v172 = vpop.f32.mrf.mxu0
  %v173 = vadd.f32 %v48, %v172
  %174 = vmatmul.bf16.gmra.mxu0 %v86
  %v175 = vpop.f32.mrf.mxu0
  %v176 = vadd.f32 %v48, %v175
  %v177 = vpop.f32.mrf.mxu0
  %v178 = vadd.f32 %v48, %v177
  %179 = vmatmul.bf16.gmra.mxu0 %v87
  %v180 = vpop.f32.mrf.mxu0
  %v181 = vadd.f32 %v48, %v180
  %v182 = vpop.f32.mrf.mxu0
  %v183 = vadd.f32 %v48, %v182
  %184 = vmatmul.bf16.gmra.mxu0 %v88
  %v185 = vpop.f32.mrf.mxu0
  %v186 = vadd.f32 %v48, %v185
  %v187 = vpop.f32.mrf.mxu0
  %v188 = vadd.f32 %v48, %v187
  %189 = vmatmul.bf16.gmra.mxu0 %v89
  %v190 = vpop.f32.mrf.mxu0
  %v191 = vadd.f32 %v48, %v190
  %v192 = vpop.f32.mrf.mxu0
  %v193 = vadd.f32 %v48, %v192
  %194 = vdwg.mxu0
  %v195 = vmax.f32 %v156, 0.0
  %v196 = vmax.f32 %v158, 0.0
  %v197 = vmax.f32 %v161, 0.0
  %v198 = vmax.f32 %v163, 0.0
  %v199 = vmax.f32 %v166, 0.0
  %v200 = vmax.f32 %v168, 0.0
  %v201 = vmax.f32 %v171, 0.0
  %v202 = vmax.f32 %v173, 0.0
  %v203 = vmax.f32 %v176, 0.0
  %v204 = vmax.f32 %v178, 0.0
  %v205 = vmax.f32 %v181, 0.0
  %v206 = vmax.f32 %v183, 0.0
  %v207 = vmax.f32 %v186, 0.0
  %v208 = vmax.f32 %v188, 0.0
  %v209 = vmax.f32 %v191, 0.0
  %v210 = vmax.f32 %v193, 0.0
  %211 = vst [vmem:[%s3] sm:$0xff] %v195
  %212 = vst [vmem:[%s3 + $0x8] sm:$0xff] %v196
  %213 = vst [vmem:[%s3 + $0x10] sm:$0xff] %v197
  %214 = vst [vmem:[%s3 + $0x18] sm:$0xff] %v198
  %215 = vst [vmem:[%s3 + $0x20] sm:$0xff] %v199
  %216 = vst [vmem:[%s3 + $0x28] sm:$0xff] %v200
  %217 = vst [vmem:[%s3 + $0x30] sm:$0xff] %v201
  %218 = vst [vmem:[%s3 + $0x38] sm:$0xff] %v202
  %219 = vst [vmem:[%s3 + $0x40] sm:$0xff] %v203
  %220 = vst [vmem:[%s3 + $0x48] sm:$0xff] %v204
  %221 = vst [vmem:[%s3 + $0x50] sm:$0xff] %v205
  %222 = vst [vmem:[%s3 + $0x58] sm:$0xff] %v206
  %223 = vst [vmem:[%s3 + $0x60] sm:$0xff] %v207
  %224 = vst [vmem:[%s3 + $0x68] sm:$0xff] %v208
  %225 = vst [vmem:[%s3 + $0x70] sm:$0xff] %v209
  %226 = vst [vmem:[%s3 + $0x78] sm:$0xff] %v210
  // Predicated region
  $region14: #{gcn_forward.5} parent=0 // pred_check
    _
  $region15: #{gcn_forward.5} parent=0 // pred_check_branch
    %228 = sbr.rel (0) target = $region17
  $region16: #{gcn_forward.5} parent=0 // pred_region
    _
  $region17: #{gcn_forward.5} parent=0 // pred_fallthru
    _
  // Predicated region
  $region18: #{gcn_forward.5} parent=0 // pred_check
    _
  $region19: #{gcn_forward.5} parent=0 // pred_check_branch
    %230 = sbr.rel (0) target = $region21
  $region20: #{gcn_forward.5} parent=0 // pred_region
    _
  $region21: #{gcn_forward.5} parent=0 // pred_fallthru
    _

// kernel: gcn_forward.3
$region0: #{gcn_forward.3}
  #allocation0 [shape = 'u32[]', space=smem, size = 0x4, offset = 0x4, fixed_abs, tag = 'smem constant byte address 0x4 - core index']
  #allocation1 [shape = 'u32[72,128]{1,0:T(1,128)}', space=vmem, size = 0x9000, scoped, tag = 'internal scratch']
  %s0 = inlined_call_operand.vmem [shape: bf16[128,128], index: 0, kind: input, shape index: {}]
  %s1 = inlined_call_operand.vmem [shape: bf16[128,128], index: 1, kind: input, shape index: {}]
  %s2 = inlined_call_operand.vmem [shape: bf16[128,128], index: 2, kind: output, shape index: {}]
  %s3 = sld [smem:[#allocation0]]
  $region18: #{gcn_forward.3} parent=0
    _
  %s5 = ssub.s32 1, %s3
  %s6 = scalar_select 0, %s5, %s3
  // Predicated region
  $region2: #{gcn_forward.3} parent=0 // pred_check
    _
  $region3: #{gcn_forward.3} parent=0 // pred_check_branch
    %8 = sbr.rel (0) target = $region5
  $region4: #{gcn_forward.3} parent=0 // pred_region
    _
  $region5: #{gcn_forward.3} parent=0 // pred_fallthru
    _
  // Predicated region
  $region6: #{gcn_forward.3} parent=0 // pred_check
    _
  $region7: #{gcn_forward.3} parent=0 // pred_check_branch
    %10 = sbr.rel (0) target = $region9
  $region8: #{gcn_forward.3} parent=0 // pred_region
    _
  $region9: #{gcn_forward.3} parent=0 // pred_fallthru
    _
  %v11 = vld [vmem:[%s0] sm:$0xf]
  %v12 = vld [vmem:[%s0 + $0x4] sm:$0xf]
  %v13 = vld [vmem:[%s0 + $0x8] sm:$0xf]
  %v14 = vld [vmem:[%s0 + $0xc] sm:$0xf]
  %v15 = vld [vmem:[%s0 + $0x10] sm:$0xf]
  %v16 = vld [vmem:[%s0 + $0x14] sm:$0xf]
  %v17 = vld [vmem:[%s0 + $0x18] sm:$0xf]
  %v18 = vld [vmem:[%s0 + $0x1c] sm:$0xf]
  %v19 = vld [vmem:[%s0 + $0x20] sm:$0xf]
  %v20 = vld [vmem:[%s0 + $0x24] sm:$0xf]
  %v21 = vld [vmem:[%s0 + $0x28] sm:$0xf]
  %v22 = vld [vmem:[%s0 + $0x2c] sm:$0xf]
  %v23 = vld [vmem:[%s0 + $0x30] sm:$0xf]
  %v24 = vld [vmem:[%s0 + $0x34] sm:$0xf]
  %v25 = vld [vmem:[%s0 + $0x38] sm:$0xf]
  %v26 = vld [vmem:[%s0 + $0x3c] sm:$0xf]
  %v27 = vld [vmem:[%s1] sm:$0xf]
  %v28 = vld [vmem:[%s1 + $0x4] sm:$0xf]
  %v29 = vld [vmem:[%s1 + $0x8] sm:$0xf]
  %v30 = vld [vmem:[%s1 + $0xc] sm:$0xf]
  %v31 = vld [vmem:[%s1 + $0x10] sm:$0xf]
  %v32 = vld [vmem:[%s1 + $0x14] sm:$0xf]
  %v33 = vld [vmem:[%s1 + $0x18] sm:$0xf]
  %v34 = vld [vmem:[%s1 + $0x1c] sm:$0xf]
  %v35 = vld [vmem:[%s1 + $0x20] sm:$0xf]
  %v36 = vld [vmem:[%s1 + $0x24] sm:$0xf]
  %v37 = vld [vmem:[%s1 + $0x28] sm:$0xf]
  %v38 = vld [vmem:[%s1 + $0x2c] sm:$0xf]
  %v39 = vld [vmem:[%s1 + $0x30] sm:$0xf]
  %v40 = vld [vmem:[%s1 + $0x34] sm:$0xf]
  %v41 = vld [vmem:[%s1 + $0x38] sm:$0xf]
  %v42 = vld [vmem:[%s1 + $0x3c] sm:$0xf]
  %v59 = vunpack.c.l.b16 %v11
  %v60 = vunpack.c.l.b16 %v12
  %v61 = vunpack.c.l.b16 %v13
  %v62 = vunpack.c.l.b16 %v14
  %v63 = vunpack.c.l.b16 %v15
  %v64 = vunpack.c.l.b16 %v16
  %v65 = vunpack.c.l.b16 %v17
  %v66 = vunpack.c.l.b16 %v18
  %v67 = vunpack.c.l.b16 %v19
  %v68 = vunpack.c.l.b16 %v20
  %v69 = vunpack.c.l.b16 %v21
  %v70 = vunpack.c.l.b16 %v22
  %v71 = vunpack.c.l.b16 %v23
  %v72 = vunpack.c.l.b16 %v24
  %v73 = vunpack.c.l.b16 %v25
  %v74 = vunpack.c.l.b16 %v26
  %v75 = vpack.c.b16 %v60, %v59
  %v76 = vpack.c.b16 %v62, %v61
  %v77 = vpack.c.b16 %v64, %v63
  %v78 = vpack.c.b16 %v66, %v65
  %v79 = vpack.c.b16 %v68, %v67
  %v80 = vpack.c.b16 %v70, %v69
  %v81 = vpack.c.b16 %v72, %v71
  %v82 = vpack.c.b16 %v74, %v73
  %v107 = vunpack.c.l.b16 %v27
  %v108 = vunpack.c.l.b16 %v28
  %v109 = vunpack.c.l.b16 %v29
  %v110 = vunpack.c.l.b16 %v30
  %v111 = vunpack.c.l.b16 %v31
  %v112 = vunpack.c.l.b16 %v32
  %v113 = vunpack.c.l.b16 %v33
  %v114 = vunpack.c.l.b16 %v34
  %v115 = vunpack.c.l.b16 %v35
  %v116 = vunpack.c.l.b16 %v36
  %v117 = vunpack.c.l.b16 %v37
  %v118 = vunpack.c.l.b16 %v38
  %v119 = vunpack.c.l.b16 %v39
  %v120 = vunpack.c.l.b16 %v40
  %v121 = vunpack.c.l.b16 %v41
  %v122 = vunpack.c.l.b16 %v42
  %v123 = vpack.c.b16 %v108, %v107
  %v124 = vpack.c.b16 %v110, %v109
  %v125 = vpack.c.b16 %v112, %v111
  %v126 = vpack.c.b16 %v114, %v113
  %v127 = vpack.c.b16 %v116, %v115
  %v128 = vpack.c.b16 %v118, %v117
  %v129 = vpack.c.b16 %v120, %v119
  %v130 = vpack.c.b16 %v122, %v121
  %139 = vmatpush.bf16.msra.mxu0 %v130
  %140 = vmatpush.bf16.msra.mxu0 %v129
  %141 = vmatpush.bf16.msra.mxu0 %v128
  %142 = vmatpush.bf16.msra.mxu0 %v127
  %143 = vmatpush.bf16.msra.mxu0 %v126
  %144 = vmatpush.bf16.msra.mxu0 %v125
  %145 = vmatpush.bf16.msra.mxu0 %v124
  %146 = vmatpush.bf16.msra.mxu0 %v123
  %147 = vmatmul.bf16.gmra.mxu0 %v75
  %v148 = vpop.f32.mrf.mxu0
  %v149 = vadd.f32 0.0, %v148
  %v150 = vpop.f32.mrf.mxu0
  %v151 = vadd.f32 0.0, %v150
  %152 = vmatmul.bf16.gmra.mxu0 %v76
  %v153 = vpop.f32.mrf.mxu0
  %v154 = vadd.f32 0.0, %v153
  %v155 = vpop.f32.mrf.mxu0
  %v156 = vadd.f32 0.0, %v155
  %157 = vmatmul.bf16.gmra.mxu0 %v77
  %v158 = vpop.f32.mrf.mxu0
  %v159 = vadd.f32 0.0, %v158
  %v160 = vpop.f32.mrf.mxu0
  %v161 = vadd.f32 0.0, %v160
  %162 = vmatmul.bf16.gmra.mxu0 %v78
  %v163 = vpop.f32.mrf.mxu0
  %v164 = vadd.f32 0.0, %v163
  %v165 = vpop.f32.mrf.mxu0
  %v166 = vadd.f32 0.0, %v165
  %167 = vmatmul.bf16.gmra.mxu0 %v79
  %v168 = vpop.f32.mrf.mxu0
  %v169 = vadd.f32 0.0, %v168
  %v170 = vpop.f32.mrf.mxu0
  %v171 = vadd.f32 0.0, %v170
  %172 = vmatmul.bf16.gmra.mxu0 %v80
  %v173 = vpop.f32.mrf.mxu0
  %v174 = vadd.f32 0.0, %v173
  %v175 = vpop.f32.mrf.mxu0
  %v176 = vadd.f32 0.0, %v175
  %177 = vmatmul.bf16.gmra.mxu0 %v81
  %v178 = vpop.f32.mrf.mxu0
  %v179 = vadd.f32 0.0, %v178
  %v180 = vpop.f32.mrf.mxu0
  %v181 = vadd.f32 0.0, %v180
  %182 = vmatmul.bf16.gmra.mxu0 %v82
  %v183 = vpop.f32.mrf.mxu0
  %v184 = vadd.f32 0.0, %v183
  %v185 = vpop.f32.mrf.mxu0
  %v186 = vadd.f32 0.0, %v185
  %187 = vdwg.mxu0
  %v188 = vpack.c.bf16 %v149, %v149
  %v189 = vpack.c.bf16 %v151, %v151
  %v190 = vpack.c.bf16 %v154, %v154
  %v191 = vpack.c.bf16 %v156, %v156
  %v192 = vpack.c.bf16 %v159, %v159
  %v193 = vpack.c.bf16 %v161, %v161
  %v194 = vpack.c.bf16 %v164, %v164
  %v195 = vpack.c.bf16 %v166, %v166
  %v196 = vpack.c.bf16 %v169, %v169
  %v197 = vpack.c.bf16 %v171, %v171
  %v198 = vpack.c.bf16 %v174, %v174
  %v199 = vpack.c.bf16 %v176, %v176
  %v200 = vpack.c.bf16 %v179, %v179
  %v201 = vpack.c.bf16 %v181, %v181
  %v202 = vpack.c.bf16 %v184, %v184
  %v203 = vpack.c.bf16 %v186, %v186
  %204 = vst [vmem:[%s2] sm:$0xf] %v188
  %205 = vst [vmem:[%s2 + $0x4] sm:$0xf] %v189
  %206 = vst [vmem:[%s2 + $0x8] sm:$0xf] %v190
  %207 = vst [vmem:[%s2 + $0xc] sm:$0xf] %v191
  %208 = vst [vmem:[%s2 + $0x10] sm:$0xf] %v192
  %209 = vst [vmem:[%s2 + $0x14] sm:$0xf] %v193
  %210 = vst [vmem:[%s2 + $0x18] sm:$0xf] %v194
  %211 = vst [vmem:[%s2 + $0x1c] sm:$0xf] %v195
  %212 = vst [vmem:[%s2 + $0x20] sm:$0xf] %v196
  %213 = vst [vmem:[%s2 + $0x24] sm:$0xf] %v197
  %214 = vst [vmem:[%s2 + $0x28] sm:$0xf] %v198
  %215 = vst [vmem:[%s2 + $0x2c] sm:$0xf] %v199
  %216 = vst [vmem:[%s2 + $0x30] sm:$0xf] %v200
  %217 = vst [vmem:[%s2 + $0x34] sm:$0xf] %v201
  %218 = vst [vmem:[%s2 + $0x38] sm:$0xf] %v202
  %219 = vst [vmem:[%s2 + $0x3c] sm:$0xf] %v203
  // Predicated region
  $region10: #{gcn_forward.3} parent=0 // pred_check
    _
  $region11: #{gcn_forward.3} parent=0 // pred_check_branch
    %221 = sbr.rel (0) target = $region13
  $region12: #{gcn_forward.3} parent=0 // pred_region
    _
  $region13: #{gcn_forward.3} parent=0 // pred_fallthru
    _
  // Predicated region
  $region14: #{gcn_forward.3} parent=0 // pred_check
    _
  $region15: #{gcn_forward.3} parent=0 // pred_check_branch
    %223 = sbr.rel (0) target = $region17
  $region16: #{gcn_forward.3} parent=0 // pred_region
    _
  $region17: #{gcn_forward.3} parent=0 // pred_fallthru
    _

// kernel: gcn_forward.4
$region0: #{gcn_forward.4}
  #allocation0 [shape = 'u32[]', space=smem, size = 0x4, offset = 0x4, fixed_abs, tag = 'smem constant byte address 0x4 - core index']
  #allocation1 [shape = 'u32[72,128]{1,0:T(1,128)}', space=vmem, size = 0x9000, scoped, tag = 'internal scratch']
  %s0 = inlined_call_operand.vmem [shape: bf16[128,128], index: 0, kind: input, shape index: {}]
  %s1 = inlined_call_operand.vmem [shape: bf16[128,128], index: 1, kind: input, shape index: {}]
  %s2 = inlined_call_operand.vmem [shape: f32[1,128], index: 2, kind: input, shape index: {}]
  %s3 = inlined_call_operand.vmem [shape: bf16[128,128], index: 3, kind: input, shape index: {}]
  %s4 = inlined_call_operand.vmem [shape: bf16[128,128], index: 4, kind: output, shape index: {}]
  %s5 = sld [smem:[#allocation0]]
  $region26: #{gcn_forward.4} parent=0
    _
  %s7 = ssub.s32 1, %s5
  %s8 = scalar_select 0, %s7, %s5
  // Predicated region
  $region2: #{gcn_forward.4} parent=0 // pred_check
    _
  $region3: #{gcn_forward.4} parent=0 // pred_check_branch
    %10 = sbr.rel (0) target = $region5
  $region4: #{gcn_forward.4} parent=0 // pred_region
    _
  $region5: #{gcn_forward.4} parent=0 // pred_fallthru
    _
  // Predicated region
  $region6: #{gcn_forward.4} parent=0 // pred_check
    _
  $region7: #{gcn_forward.4} parent=0 // pred_check_branch
    %12 = sbr.rel (0) target = $region9
  $region8: #{gcn_forward.4} parent=0 // pred_region
    _
  $region9: #{gcn_forward.4} parent=0 // pred_fallthru
    _
  // Predicated region
  $region10: #{gcn_forward.4} parent=0 // pred_check
    _
  $region11: #{gcn_forward.4} parent=0 // pred_check_branch
    %14 = sbr.rel (0) target = $region13
  $region12: #{gcn_forward.4} parent=0 // pred_region
    _
  $region13: #{gcn_forward.4} parent=0 // pred_fallthru
    _
  // Predicated region
  $region14: #{gcn_forward.4} parent=0 // pred_check
    _
  $region15: #{gcn_forward.4} parent=0 // pred_check_branch
    %16 = sbr.rel (0) target = $region17
  $region16: #{gcn_forward.4} parent=0 // pred_region
    _
  $region17: #{gcn_forward.4} parent=0 // pred_fallthru
    _
  %v17 = vld [vmem:[%s0] sm:$0xf]
  %v18 = vld [vmem:[%s0 + $0x4] sm:$0xf]
  %v19 = vld [vmem:[%s0 + $0x8] sm:$0xf]
  %v20 = vld [vmem:[%s0 + $0xc] sm:$0xf]
  %v21 = vld [vmem:[%s0 + $0x10] sm:$0xf]
  %v22 = vld [vmem:[%s0 + $0x14] sm:$0xf]
  %v23 = vld [vmem:[%s0 + $0x18] sm:$0xf]
  %v24 = vld [vmem:[%s0 + $0x1c] sm:$0xf]
  %v25 = vld [vmem:[%s0 + $0x20] sm:$0xf]
  %v26 = vld [vmem:[%s0 + $0x24] sm:$0xf]
  %v27 = vld [vmem:[%s0 + $0x28] sm:$0xf]
  %v28 = vld [vmem:[%s0 + $0x2c] sm:$0xf]
  %v29 = vld [vmem:[%s0 + $0x30] sm:$0xf]
  %v30 = vld [vmem:[%s0 + $0x34] sm:$0xf]
  %v31 = vld [vmem:[%s0 + $0x38] sm:$0xf]
  %v32 = vld [vmem:[%s0 + $0x3c] sm:$0xf]
  %v33 = vld [vmem:[%s1] sm:$0xf]
  %v34 = vld [vmem:[%s1 + $0x4] sm:$0xf]
  %v35 = vld [vmem:[%s1 + $0x8] sm:$0xf]
  %v36 = vld [vmem:[%s1 + $0xc] sm:$0xf]
  %v37 = vld [vmem:[%s1 + $0x10] sm:$0xf]
  %v38 = vld [vmem:[%s1 + $0x14] sm:$0xf]
  %v39 = vld [vmem:[%s1 + $0x18] sm:$0xf]
  %v40 = vld [vmem:[%s1 + $0x1c] sm:$0xf]
  %v41 = vld [vmem:[%s1 + $0x20] sm:$0xf]
  %v42 = vld [vmem:[%s1 + $0x24] sm:$0xf]
  %v43 = vld [vmem:[%s1 + $0x28] sm:$0xf]
  %v44 = vld [vmem:[%s1 + $0x2c] sm:$0xf]
  %v45 = vld [vmem:[%s1 + $0x30] sm:$0xf]
  %v46 = vld [vmem:[%s1 + $0x34] sm:$0xf]
  %v47 = vld [vmem:[%s1 + $0x38] sm:$0xf]
  %v48 = vld [vmem:[%s1 + $0x3c] sm:$0xf]
  %v49 = vld [vmem:[%s2] sm:$0x1]
  %v51 = vperm.slane %v49, 0
  %v69 = vunpack.c.l.b16 %v17
  %v70 = vunpack.c.l.b16 %v18
  %v71 = vunpack.c.l.b16 %v19
  %v72 = vunpack.c.l.b16 %v20
  %v73 = vunpack.c.l.b16 %v21
  %v74 = vunpack.c.l.b16 %v22
  %v75 = vunpack.c.l.b16 %v23
  %v76 = vunpack.c.l.b16 %v24
  %v77 = vunpack.c.l.b16 %v25
  %v78 = vunpack.c.l.b16 %v26
  %v79 = vunpack.c.l.b16 %v27
  %v80 = vunpack.c.l.b16 %v28
  %v81 = vunpack.c.l.b16 %v29
  %v82 = vunpack.c.l.b16 %v30
  %v83 = vunpack.c.l.b16 %v31
  %v84 = vunpack.c.l.b16 %v32
  %v85 = vpack.c.b16 %v70, %v69
  %v86 = vpack.c.b16 %v72, %v71
  %v87 = vpack.c.b16 %v74, %v73
  %v88 = vpack.c.b16 %v76, %v75
  %v89 = vpack.c.b16 %v78, %v77
  %v90 = vpack.c.b16 %v80, %v79
  %v91 = vpack.c.b16 %v82, %v81
  %v92 = vpack.c.b16 %v84, %v83
  %v117 = vunpack.c.l.b16 %v33
  %v118 = vunpack.c.l.b16 %v34
  %v119 = vunpack.c.l.b16 %v35
  %v120 = vunpack.c.l.b16 %v36
  %v121 = vunpack.c.l.b16 %v37
  %v122 = vunpack.c.l.b16 %v38
  %v123 = vunpack.c.l.b16 %v39
  %v124 = vunpack.c.l.b16 %v40
  %v125 = vunpack.c.l.b16 %v41
  %v126 = vunpack.c.l.b16 %v42
  %v127 = vunpack.c.l.b16 %v43
  %v128 = vunpack.c.l.b16 %v44
  %v129 = vunpack.c.l.b16 %v45
  %v130 = vunpack.c.l.b16 %v46
  %v131 = vunpack.c.l.b16 %v47
  %v132 = vunpack.c.l.b16 %v48
  %v133 = vpack.c.b16 %v118, %v117
  %v134 = vpack.c.b16 %v120, %v119
  %v135 = vpack.c.b16 %v122, %v121
  %v136 = vpack.c.b16 %v124, %v123
  %v137 = vpack.c.b16 %v126, %v125
  %v138 = vpack.c.b16 %v128, %v127
  %v139 = vpack.c.b16 %v130, %v129
  %v140 = vpack.c.b16 %v132, %v131
  %149 = vmatpush.bf16.msra.mxu0 %v140
  %150 = vmatpush.bf16.msra.mxu0 %v139
  %151 = vmatpush.bf16.msra.mxu0 %v138
  %152 = vmatpush.bf16.msra.mxu0 %v137
  %153 = vmatpush.bf16.msra.mxu0 %v136
  %154 = vmatpush.bf16.msra.mxu0 %v135
  %155 = vmatpush.bf16.msra.mxu0 %v134
  %156 = vmatpush.bf16.msra.mxu0 %v133
  %157 = vmatmul.bf16.gmra.mxu0 %v85
  %v158 = vpop.f32.mrf.mxu0
  %v159 = vadd.f32 %v51, %v158
  %v160 = vpop.f32.mrf.mxu0
  %v161 = vadd.f32 %v51, %v160
  %162 = vmatmul.bf16.gmra.mxu0 %v86
  %v163 = vpop.f32.mrf.mxu0
  %v164 = vadd.f32 %v51, %v163
  %v165 = vpop.f32.mrf.mxu0
  %v166 = vadd.f32 %v51, %v165
  %167 = vmatmul.bf16.gmra.mxu0 %v87
  %v168 = vpop.f32.mrf.mxu0
  %v169 = vadd.f32 %v51, %v168
  %v170 = vpop.f32.mrf.mxu0
  %v171 = vadd.f32 %v51, %v170
  %172 = vmatmul.bf16.gmra.mxu0 %v88
  %v173 = vpop.f32.mrf.mxu0
  %v174 = vadd.f32 %v51, %v173
  %v175 = vpop.f32.mrf.mxu0
  %v176 = vadd.f32 %v51, %v175
  %177 = vmatmul.bf16.gmra.mxu0 %v89
  %v178 = vpop.f32.mrf.mxu0
  %v179 = vadd.f32 %v51, %v178
  %v180 = vpop.f32.mrf.mxu0
  %v181 = vadd.f32 %v51, %v180
  %182 = vmatmul.bf16.gmra.mxu0 %v90
  %v183 = vpop.f32.mrf.mxu0
  %v184 = vadd.f32 %v51, %v183
  %v185 = vpop.f32.mrf.mxu0
  %v186 = vadd.f32 %v51, %v185
  %187 = vmatmul.bf16.gmra.mxu0 %v91
  %v188 = vpop.f32.mrf.mxu0
  %v189 = vadd.f32 %v51, %v188
  %v190 = vpop.f32.mrf.mxu0
  %v191 = vadd.f32 %v51, %v190
  %192 = vmatmul.bf16.gmra.mxu0 %v92
  %v193 = vpop.f32.mrf.mxu0
  %v194 = vadd.f32 %v51, %v193
  %v195 = vpop.f32.mrf.mxu0
  %v196 = vadd.f32 %v51, %v195
  %197 = vdwg.mxu0
  %v198 = vmax.f32 %v159, 0.0
  %v199 = vmax.f32 %v161, 0.0
  %v200 = vmax.f32 %v164, 0.0
  %v201 = vmax.f32 %v166, 0.0
  %v202 = vmax.f32 %v169, 0.0
  %v203 = vmax.f32 %v171, 0.0
  %v204 = vmax.f32 %v174, 0.0
  %v205 = vmax.f32 %v176, 0.0
  %v206 = vmax.f32 %v179, 0.0
  %v207 = vmax.f32 %v181, 0.0
  %v208 = vmax.f32 %v184, 0.0
  %v209 = vmax.f32 %v186, 0.0
  %v210 = vmax.f32 %v189, 0.0
  %v211 = vmax.f32 %v191, 0.0
  %v212 = vmax.f32 %v194, 0.0
  %v213 = vmax.f32 %v196, 0.0
  %v214 = vpack.c.bf16 %v199, %v198
  %v215 = vpack.c.bf16 %v201, %v200
  %v216 = vpack.c.bf16 %v203, %v202
  %v217 = vpack.c.bf16 %v205, %v204
  %v218 = vpack.c.bf16 %v207, %v206
  %v219 = vpack.c.bf16 %v209, %v208
  %v220 = vpack.c.bf16 %v211, %v210
  %v221 = vpack.c.bf16 %v213, %v212
  %v222 = vld [vmem:[%s3] sm:$0xf]
  %v223 = vld [vmem:[%s3 + $0x4] sm:$0xf]
  %v224 = vld [vmem:[%s3 + $0x8] sm:$0xf]
  %v225 = vld [vmem:[%s3 + $0xc] sm:$0xf]
  %v226 = vld [vmem:[%s3 + $0x10] sm:$0xf]
  %v227 = vld [vmem:[%s3 + $0x14] sm:$0xf]
  %v228 = vld [vmem:[%s3 + $0x18] sm:$0xf]
  %v229 = vld [vmem:[%s3 + $0x1c] sm:$0xf]
  %v230 = vld [vmem:[%s3 + $0x20] sm:$0xf]
  %v231 = vld [vmem:[%s3 + $0x24] sm:$0xf]
  %v232 = vld [vmem:[%s3 + $0x28] sm:$0xf]
  %v233 = vld [vmem:[%s3 + $0x2c] sm:$0xf]
  %v234 = vld [vmem:[%s3 + $0x30] sm:$0xf]
  %v235 = vld [vmem:[%s3 + $0x34] sm:$0xf]
  %v236 = vld [vmem:[%s3 + $0x38] sm:$0xf]
  %v237 = vld [vmem:[%s3 + $0x3c] sm:$0xf]
  %v254 = vunpack.c.l.b16 %v222
  %v255 = vunpack.c.l.b16 %v223
  %v256 = vunpack.c.l.b16 %v224
  %v257 = vunpack.c.l.b16 %v225
  %v258 = vunpack.c.l.b16 %v226
  %v259 = vunpack.c.l.b16 %v227
  %v260 = vunpack.c.l.b16 %v228
  %v261 = vunpack.c.l.b16 %v229
  %v262 = vunpack.c.l.b16 %v230
  %v263 = vunpack.c.l.b16 %v231
  %v264 = vunpack.c.l.b16 %v232
  %v265 = vunpack.c.l.b16 %v233
  %v266 = vunpack.c.l.b16 %v234
  %v267 = vunpack.c.l.b16 %v235
  %v268 = vunpack.c.l.b16 %v236
  %v269 = vunpack.c.l.b16 %v237
  %v270 = vpack.c.b16 %v255, %v254
  %v271 = vpack.c.b16 %v257, %v256
  %v272 = vpack.c.b16 %v259, %v258
  %v273 = vpack.c.b16 %v261, %v260
  %v274 = vpack.c.b16 %v263, %v262
  %v275 = vpack.c.b16 %v265, %v264
  %v276 = vpack.c.b16 %v267, %v266
  %v277 = vpack.c.b16 %v269, %v268
  %286 = vmatpush.bf16.msra.mxu0 %v277
  %287 = vmatpush.bf16.msra.mxu0 %v276
  %288 = vmatpush.bf16.msra.mxu0 %v275
  %289 = vmatpush.bf16.msra.mxu0 %v274
  %290 = vmatpush.bf16.msra.mxu0 %v273
  %291 = vmatpush.bf16.msra.mxu0 %v272
  %292 = vmatpush.bf16.msra.mxu0 %v271
  %293 = vmatpush.bf16.msra.mxu0 %v270
  %294 = vmatmul.bf16.gmra.mxu0 %v214
  %v295 = vpop.f32.mrf.mxu0
  %v296 = vadd.f32 0.0, %v295
  %v297 = vpop.f32.mrf.mxu0
  %v298 = vadd.f32 0.0, %v297
  %299 = vmatmul.bf16.gmra.mxu0 %v215
  %v300 = vpop.f32.mrf.mxu0
  %v301 = vadd.f32 0.0, %v300
  %v302 = vpop.f32.mrf.mxu0
  %v303 = vadd.f32 0.0, %v302
  %304 = vmatmul.bf16.gmra.mxu0 %v216
  %v305 = vpop.f32.mrf.mxu0
  %v306 = vadd.f32 0.0, %v305
  %v307 = vpop.f32.mrf.mxu0
  %v308 = vadd.f32 0.0, %v307
  %309 = vmatmul.bf16.gmra.mxu0 %v217
  %v310 = vpop.f32.mrf.mxu0
  %v311 = vadd.f32 0.0, %v310
  %v312 = vpop.f32.mrf.mxu0
  %v313 = vadd.f32 0.0, %v312
  %314 = vmatmul.bf16.gmra.mxu0 %v218
  %v315 = vpop.f32.mrf.mxu0
  %v316 = vadd.f32 0.0, %v315
  %v317 = vpop.f32.mrf.mxu0
  %v318 = vadd.f32 0.0, %v317
  %319 = vmatmul.bf16.gmra.mxu0 %v219
  %v320 = vpop.f32.mrf.mxu0
  %v321 = vadd.f32 0.0, %v320
  %v322 = vpop.f32.mrf.mxu0
  %v323 = vadd.f32 0.0, %v322
  %324 = vmatmul.bf16.gmra.mxu0 %v220
  %v325 = vpop.f32.mrf.mxu0
  %v326 = vadd.f32 0.0, %v325
  %v327 = vpop.f32.mrf.mxu0
  %v328 = vadd.f32 0.0, %v327
  %329 = vmatmul.bf16.gmra.mxu0 %v221
  %v330 = vpop.f32.mrf.mxu0
  %v331 = vadd.f32 0.0, %v330
  %v332 = vpop.f32.mrf.mxu0
  %v333 = vadd.f32 0.0, %v332
  %334 = vdwg.mxu0
  %v335 = vpack.c.bf16 %v296, %v296
  %v336 = vpack.c.bf16 %v298, %v298
  %v337 = vpack.c.bf16 %v301, %v301
  %v338 = vpack.c.bf16 %v303, %v303
  %v339 = vpack.c.bf16 %v306, %v306
  %v340 = vpack.c.bf16 %v308, %v308
  %v341 = vpack.c.bf16 %v311, %v311
  %v342 = vpack.c.bf16 %v313, %v313
  %v343 = vpack.c.bf16 %v316, %v316
  %v344 = vpack.c.bf16 %v318, %v318
  %v345 = vpack.c.bf16 %v321, %v321
  %v346 = vpack.c.bf16 %v323, %v323
  %v347 = vpack.c.bf16 %v326, %v326
  %v348 = vpack.c.bf16 %v328, %v328
  %v349 = vpack.c.bf16 %v331, %v331
  %v350 = vpack.c.bf16 %v333, %v333
  %351 = vst [vmem:[%s4] sm:$0xf] %v335
  %352 = vst [vmem:[%s4 + $0x4] sm:$0xf] %v336
  %353 = vst [vmem:[%s4 + $0x8] sm:$0xf] %v337
  %354 = vst [vmem:[%s4 + $0xc] sm:$0xf] %v338
  %355 = vst [vmem:[%s4 + $0x10] sm:$0xf] %v339
  %356 = vst [vmem:[%s4 + $0x14] sm:$0xf] %v340
  %357 = vst [vmem:[%s4 + $0x18] sm:$0xf] %v341
  %358 = vst [vmem:[%s4 + $0x1c] sm:$0xf] %v342
  %359 = vst [vmem:[%s4 + $0x20] sm:$0xf] %v343
  %360 = vst [vmem:[%s4 + $0x24] sm:$0xf] %v344
  %361 = vst [vmem:[%s4 + $0x28] sm:$0xf] %v345
  %362 = vst [vmem:[%s4 + $0x2c] sm:$0xf] %v346
  %363 = vst [vmem:[%s4 + $0x30] sm:$0xf] %v347
  %364 = vst [vmem:[%s4 + $0x34] sm:$0xf] %v348
  %365 = vst [vmem:[%s4 + $0x38] sm:$0xf] %v349
  %366 = vst [vmem:[%s4 + $0x3c] sm:$0xf] %v350
  // Predicated region
  $region18: #{gcn_forward.4} parent=0 // pred_check
    _
  $region19: #{gcn_forward.4} parent=0 // pred_check_branch
    %368 = sbr.rel (0) target = $region21
  $region20: #{gcn_forward.4} parent=0 // pred_region
    _
  $region21: #{gcn_forward.4} parent=0 // pred_fallthru
    _
  // Predicated region
  $region22: #{gcn_forward.4} parent=0 // pred_check
    _
  $region23: #{gcn_forward.4} parent=0 // pred_check_branch
    %370 = sbr.rel (0) target = $region25
  $region24: #{gcn_forward.4} parent=0 // pred_region
    _
  $region25: #{gcn_forward.4} parent=0 // pred_fallthru
    _

</llo_original>
